<compile_context>
chip_gen: v5e
topology: v5e:2x2
jax: 0.10.0
libtpu: 0.0.40
codegen_flags: <defaults>
</compile_context>

<pallas_src>
import functools

import jax
import jax.numpy as jnp
from jax.experimental import pallas as pl
from jax.experimental.pallas import tpu as pltpu  # noqa: F401  (TPU backend)

B = 2          # batch
FEAT = 16      # `feat`  (BatchNorm1d channel count)
IN_FEAT = 32   # `in_feat`
N_CLASS = 8    # `n_class`
N_HIDDEN = 64  # fc1 output width (fixed by the module definition)
EPS = 1e-5     # BatchNorm1d default eps


# ---------------------------------------------------------------------------
# Fused kernel: fc1 + BN1 + (fc2..fc5 folded) + BN2 + fc6 — single block, no grid
# ---------------------------------------------------------------------------
def _class_head_kernel(x_ref, w_ref, p_ref, o_ref, *,
                       n_batch, feat, in_feat, n_hidden, n_class):
    m = n_batch * feat

    # ---- unpack the packed parameter slabs (static slices, no extra DMAs) ----
    w1 = w_ref[0:in_feat, 0:n_hidden]                                       # (in_feat, 64)
    w_mid = w_ref[in_feat:in_feat + n_hidden, 0:n_class]                    # (64, n_class)
    w6 = w_ref[in_feat + n_hidden:in_feat + n_hidden + n_class, 0:n_class]  # (n_class, n_class)

    p = p_ref[...]                      # (8 + feat, 64)
    b1 = p[0:1, 0:n_hidden]             # (1, 64)
    b_mid = p[1:2, 0:n_class]           # (1, n_class)
    b6 = p[2:3, 0:n_class]              # (1, n_class)
    bn = p[8:8 + feat, 0:4]             # (feat, 4) = [g1 | be1 | g2 | be2]
    g1, be1 = bn[:, 0:1], bn[:, 1:2]    # (feat, 1): broadcasts over (nb, feat, L)
    g2, be2 = bn[:, 2:3], bn[:, 3:4]

    def bn_rows(h2d, gamma, beta, inv_count):
        """Training-mode BatchNorm1d(feat); channel of row r is r % feat."""
        lanes = h2d.shape[1]
        h3 = h2d.reshape(n_batch, feat, lanes)
        # fused single-pass stats: sum(h) and sum(h*h) per channel
        s1 = jnp.sum(jnp.sum(h3, axis=2, keepdims=True), axis=0, keepdims=True)
        s2 = jnp.sum(jnp.sum(h3 * h3, axis=2, keepdims=True), axis=0, keepdims=True)
        mean = s1 * inv_count                          # (1, feat, 1)
        var = s2 * inv_count - mean * mean             # biased variance
        scale = gamma * jax.lax.rsqrt(var + EPS)       # (feat,1) -> broadcasts
        h3 = (h3 - mean) * scale + beta
        return h3.reshape(m, lanes)

    # fc1
    x2d = x_ref[...].reshape(m, in_feat)
    h = jnp.dot(x2d, w1, preferred_element_type=jnp.float32) + b1           # (M, 64)
    # ln1
    h = bn_rows(h, g1, be1, 1.0 / (n_batch * n_hidden))
    # fc2..fc5 folded into one affine map (exact algebraic fold, done at prepare time)
    h = jnp.dot(h, w_mid, preferred_element_type=jnp.float32) + b_mid       # (M, n_class)
    # ln2
    h = bn_rows(h, g2, be2, 1.0 / (n_batch * n_class))
    # fc6
    out = jnp.dot(h, w6, preferred_element_type=jnp.float32) + b6           # (M, n_class)
    o_ref[...] = out.reshape(n_batch, feat, n_class)


# ---------------------------------------------------------------------------
# One-time parameter preparation (hoisted OFF the per-call path)
# ---------------------------------------------------------------------------
def prepare_class_head(params):
    """Fold fc2..fc5 and pack all parameters into two slabs. Call ONCE."""
    (w1, b1, w2, b2, w3, b3, w4, b4, w5, b5, w6, b6, g1, be1, g2, be2) = params
    in_feat, n_hidden = w1.shape
    n_class = w6.shape[1]
    feat = g1.shape[0]

    # exact algebraic fold of the consecutive affine maps fc2..fc5
    w_mid = w2 @ w3 @ w4 @ w5                                   # (64, n_class)
    b_mid = ((b2 @ w3 + b3) @ w4 + b4) @ w5 + b5                # (1, n_class)

    wcols = max(n_hidden, n_class)
    w_slab = jnp.zeros((in_feat + n_hidden + n_class, wcols), jnp.float32)
    w_slab = w_slab.at[0:in_feat, 0:n_hidden].set(w1)
    w_slab = w_slab.at[in_feat:in_feat + n_hidden, 0:n_class].set(w_mid)
    w_slab = w_slab.at[in_feat + n_hidden:, 0:n_class].set(w6)

    pcols = max(n_hidden, n_class, 4)
    p_slab = jnp.zeros((8 + feat, pcols), jnp.float32)
    p_slab = p_slab.at[0, 0:n_hidden].set(b1[0])
    p_slab = p_slab.at[1, 0:n_class].set(b_mid[0])
    p_slab = p_slab.at[2, 0:n_class].set(b6[0])
    p_slab = p_slab.at[8:8 + feat, 0].set(g1)
    p_slab = p_slab.at[8:8 + feat, 1].set(be1)
    p_slab = p_slab.at[8:8 + feat, 2].set(g2)
    p_slab = p_slab.at[8:8 + feat, 3].set(be2)
    return w_slab, p_slab


@jax.jit
def class_head_forward(x, w_slab, p_slab):
    """x: (B, feat, in_feat) -> (B, feat, n_class); training-mode BatchNorm.

    The jit body is ONLY the pallas_call — all parameter algebra/packing lives
    in prepare_class_head (one-time).
    """
    batch, feat, in_feat = x.shape
    n_class = w_slab.shape[0] - in_feat - N_HIDDEN
    kernel = functools.partial(_class_head_kernel, n_batch=batch, feat=feat,
                               in_feat=in_feat, n_hidden=N_HIDDEN, n_class=n_class)
    # Single invocation, no grid: whole problem (<100 KiB) is resident in VMEM,
    # so no per-grid-step overhead / second launch / HBM intermediate traffic.
    # (Scaling up many independent head instances should add a leading
    # "parallel" grid axis instead — see review notes — not done at this size.)
    return pl.pallas_call(
        kernel,
        out_shape=jax.ShapeDtypeStruct((batch, feat, n_class), jnp.float32),
    )(x, w_slab, p_slab)


# ---------------------------------------------------------------------------
# Parameters (PyTorch nn.Linear default init; weights stored as (in, out))
# ---------------------------------------------------------------------------
def init_params(key):
    ks = jax.random.split(key, 10)

    def linear(k, fan_in, fan_out):
        kw, kb = jax.random.split(k)
        bound = 1.0 / (fan_in ** 0.5)
        w = jax.random.uniform(kw, (fan_in, fan_out), jnp.float32, -bound, bound)
        b = jax.random.uniform(kb, (1, fan_out), jnp.float32, -bound, bound)
        return w, b

    w1, b1 = linear(ks[0], IN_FEAT, 64)        # fc1
    w2, b2 = linear(ks[1], 64, 64)             # fc2
    w3, b3 = linear(ks[2], 64, 128)            # fc3
    w4, b4 = linear(ks[3], 128, 64)            # fc4
    w5, b5 = linear(ks[4], 64, N_CLASS)        # fc5
    w6, b6 = linear(ks[5], N_CLASS, N_CLASS)   # fc6
    # BatchNorm affine params (randomised so the affine path is exercised;
    # PyTorch default would be gamma=1, beta=0 — semantics identical)
    g1 = jax.random.uniform(ks[6], (FEAT,), jnp.float32, 0.5, 1.5)
    be1 = jax.random.uniform(ks[7], (FEAT,), jnp.float32, -0.5, 0.5)
    g2 = jax.random.uniform(ks[8], (FEAT,), jnp.float32, 0.5, 1.5)
    be2 = jax.random.uniform(ks[9], (FEAT,), jnp.float32, -0.5, 0.5)
    return (w1, b1, w2, b2, w3, b3, w4, b4, w5, b5, w6, b6, g1, be1, g2, be2)


def class_head_ref(x, params):
    """Pure-JAX reference mirroring the PyTorch forward exactly (unfolded fc2..fc5)."""
    (w1, b1, w2, b2, w3, b3, w4, b4, w5, b5, w6, b6, g1, be1, g2, be2) = params

    def bn(h, gamma, beta):
        # BatchNorm1d(feat) on (B, feat, L): per-channel stats over (B, L), biased var
        mean = jnp.mean(h, axis=(0, 2), keepdims=True)
        var = jnp.mean((h - mean) ** 2, axis=(0, 2), keepdims=True)
        return ((h - mean) * jax.lax.rsqrt(var + EPS)
                * gamma[None, :, None] + beta[None, :, None])

    h = x @ w1 + b1
    h = bn(h, g1, be1)
    h = h @ w2 + b2
    h = h @ w3 + b3
    h = h @ w4 + b4
    h = h @ w5 + b5
    h = bn(h, g2, be2)
    return h @ w6 + b6


if __name__ == "__main__":
    key = jax.random.PRNGKey(0)
    kx, kp = jax.random.split(key)
    x = jax.random.normal(kx, (B, FEAT, IN_FEAT), dtype=jnp.float32)  # (B, feat, in_feat)
    params = init_params(kp)

    # One-time folding / packing (off the per-call path).
    w_slab, p_slab = prepare_class_head(params)
    w_slab, p_slab = jax.block_until_ready((w_slab, p_slab))

    out = class_head_forward(x, w_slab, p_slab)
    out = jax.block_until_ready(out)

    ref = class_head_ref(x, params)
    assert out.shape == (B, FEAT, N_CLASS), out.shape
    max_err = float(jnp.max(jnp.abs(out - ref)))
    assert jnp.allclose(out, ref, atol=1e-4, rtol=1e-4), max_err
    print("KERNEL_OK")
</pallas_src>

<mosaic_0001>
module attributes {stable_mosaic.version = 11 : i64} {
  func.func @_class_head_kernel(%arg0: memref<2x16x32xf32, #tpu.memory_space<vmem>>, %arg1: memref<104x64xf32, #tpu.memory_space<vmem>>, %arg2: memref<24x64xf32, #tpu.memory_space<vmem>>, %arg3: memref<2x16x8xf32, #tpu.memory_space<vmem>>) attributes {dimension_semantics = [], scalar_prefetch = 0 : i64, scratch_operands = 0 : i64, tpu.core_type = #tpu.core_type<tc>} {
    %c0 = arith.constant 0 : index
    %c0_0 = arith.constant 0 : index
    %0 = vector.load %arg1[%c0, %c0_0] : memref<104x64xf32, #tpu.memory_space<vmem>>, vector<32x64xf32>
    %c32 = arith.constant 32 : index
    %c0_1 = arith.constant 0 : index
    %1 = vector.load %arg1[%c32, %c0_1] : memref<104x64xf32, #tpu.memory_space<vmem>>, vector<64x8xf32>
    %c96 = arith.constant 96 : index
    %c0_2 = arith.constant 0 : index
    %2 = vector.load %arg1[%c96, %c0_2] : memref<104x64xf32, #tpu.memory_space<vmem>>, vector<8x8xf32>
    %c0_3 = arith.constant 0 : index
    %c0_4 = arith.constant 0 : index
    %3 = vector.load %arg2[%c0_3, %c0_4] : memref<24x64xf32, #tpu.memory_space<vmem>>, vector<24x64xf32>
    %4 = vector.extract_strided_slice %3 {offsets = [0, 0], sizes = [1, 64], strides = [1, 1]} : vector<24x64xf32> to vector<1x64xf32>
    %5 = vector.extract_strided_slice %3 {offsets = [1, 0], sizes = [1, 8], strides = [1, 1]} : vector<24x64xf32> to vector<1x8xf32>
    %6 = vector.extract_strided_slice %3 {offsets = [2, 0], sizes = [1, 8], strides = [1, 1]} : vector<24x64xf32> to vector<1x8xf32>
    %7 = vector.extract_strided_slice %3 {offsets = [8, 0], sizes = [16, 4], strides = [1, 1]} : vector<24x64xf32> to vector<16x4xf32>
    %8 = vector.extract_strided_slice %7 {offsets = [0, 0], sizes = [16, 1], strides = [1, 1]} : vector<16x4xf32> to vector<16x1xf32>
    %9 = vector.extract_strided_slice %7 {offsets = [0, 1], sizes = [16, 1], strides = [1, 1]} : vector<16x4xf32> to vector<16x1xf32>
    %10 = vector.extract_strided_slice %7 {offsets = [0, 2], sizes = [16, 1], strides = [1, 1]} : vector<16x4xf32> to vector<16x1xf32>
    %11 = vector.extract_strided_slice %7 {offsets = [0, 3], sizes = [16, 1], strides = [1, 1]} : vector<16x4xf32> to vector<16x1xf32>
    %c0_5 = arith.constant 0 : index
    %c0_6 = arith.constant 0 : index
    %c0_7 = arith.constant 0 : index
    %12 = vector.load %arg0[%c0_5, %c0_6, %c0_7] : memref<2x16x32xf32, #tpu.memory_space<vmem>>, vector<2x16x32xf32>
    %13 = vector.shape_cast %12 : vector<2x16x32xf32> to vector<32x32xf32>
    %cst = arith.constant dense<0.000000e+00> : vector<32x64xf32>
    %14 = tpu.matmul %13, %0, %cst {dimension_numbers = #tpu.dot_dimension_numbers<[1], [0], [0], [1], [0, 0, 1, 1], [], []>} : vector<32x32xf32>, vector<32x64xf32>, vector<32x64xf32> -> vector<32x64xf32>
    %15 = vector.broadcast %4 : vector<1x64xf32> to vector<32x64xf32>
    %16 = arith.addf %14, %15 : vector<32x64xf32>
    %17 = vector.shape_cast %16 : vector<32x64xf32> to vector<2x16x64xf32>
    %cst_8 = arith.constant dense<0.000000e+00> : vector<2x16xf32>
    %18 = vector.multi_reduction <add>, %17, %cst_8 [2] : vector<2x16x64xf32> to vector<2x16xf32>
    %19 = vector.shape_cast %18 : vector<2x16xf32> to vector<2x16x1xf32>
    %cst_9 = arith.constant dense<0.000000e+00> : vector<16x1xf32>
    %20 = vector.multi_reduction <add>, %19, %cst_9 [0] : vector<2x16x1xf32> to vector<16x1xf32>
    %21 = vector.shape_cast %20 : vector<16x1xf32> to vector<1x16x1xf32>
    %22 = arith.mulf %17, %17 : vector<2x16x64xf32>
    %cst_10 = arith.constant dense<0.000000e+00> : vector<2x16xf32>
    %23 = vector.multi_reduction <add>, %22, %cst_10 [2] : vector<2x16x64xf32> to vector<2x16xf32>
    %24 = vector.shape_cast %23 : vector<2x16xf32> to vector<2x16x1xf32>
    %cst_11 = arith.constant dense<0.000000e+00> : vector<16x1xf32>
    %25 = vector.multi_reduction <add>, %24, %cst_11 [0] : vector<2x16x1xf32> to vector<16x1xf32>
    %26 = vector.shape_cast %25 : vector<16x1xf32> to vector<1x16x1xf32>
    %cst_12 = arith.constant 7.812500e-03 : f32
    %27 = vector.broadcast %cst_12 : f32 to vector<1x16x1xf32>
    %28 = arith.mulf %21, %27 : vector<1x16x1xf32>
    %cst_13 = arith.constant 7.812500e-03 : f32
    %29 = vector.broadcast %cst_13 : f32 to vector<1x16x1xf32>
    %30 = arith.mulf %26, %29 : vector<1x16x1xf32>
    %31 = arith.mulf %28, %28 : vector<1x16x1xf32>
    %32 = arith.subf %30, %31 : vector<1x16x1xf32>
    %cst_14 = arith.constant 9.99999974E-6 : f32
    %33 = vector.broadcast %cst_14 : f32 to vector<1x16x1xf32>
    %34 = arith.addf %32, %33 : vector<1x16x1xf32>
    %35 = math.rsqrt %34 : vector<1x16x1xf32>
    %36 = vector.shape_cast %8 : vector<16x1xf32> to vector<1x16x1xf32>
    %37 = arith.mulf %36, %35 : vector<1x16x1xf32>
    %38 = vector.broadcast %28 : vector<1x16x1xf32> to vector<2x16x64xf32>
    %39 = arith.subf %17, %38 : vector<2x16x64xf32>
    %40 = vector.broadcast %37 : vector<1x16x1xf32> to vector<2x16x64xf32>
    %41 = arith.mulf %39, %40 : vector<2x16x64xf32>
    %42 = vector.shape_cast %9 : vector<16x1xf32> to vector<1x16x1xf32>
    %43 = vector.broadcast %42 : vector<1x16x1xf32> to vector<2x16x64xf32>
    %44 = arith.addf %41, %43 : vector<2x16x64xf32>
    %45 = vector.shape_cast %44 : vector<2x16x64xf32> to vector<32x64xf32>
    %cst_15 = arith.constant dense<0.000000e+00> : vector<32x8xf32>
    %46 = tpu.matmul %45, %1, %cst_15 {dimension_numbers = #tpu.dot_dimension_numbers<[1], [0], [0], [1], [0, 0, 1, 1], [], []>} : vector<32x64xf32>, vector<64x8xf32>, vector<32x8xf32> -> vector<32x8xf32>
    %47 = vector.broadcast %5 : vector<1x8xf32> to vector<32x8xf32>
    %48 = arith.addf %46, %47 : vector<32x8xf32>
    %49 = vector.shape_cast %48 : vector<32x8xf32> to vector<2x16x8xf32>
    %cst_16 = arith.constant dense<0.000000e+00> : vector<2x16xf32>
    %50 = vector.multi_reduction <add>, %49, %cst_16 [2] : vector<2x16x8xf32> to vector<2x16xf32>
    %51 = vector.shape_cast %50 : vector<2x16xf32> to vector<2x16x1xf32>
    %cst_17 = arith.constant dense<0.000000e+00> : vector<16x1xf32>
    %52 = vector.multi_reduction <add>, %51, %cst_17 [0] : vector<2x16x1xf32> to vector<16x1xf32>
    %53 = vector.shape_cast %52 : vector<16x1xf32> to vector<1x16x1xf32>
    %54 = arith.mulf %49, %49 : vector<2x16x8xf32>
    %cst_18 = arith.constant dense<0.000000e+00> : vector<2x16xf32>
    %55 = vector.multi_reduction <add>, %54, %cst_18 [2] : vector<2x16x8xf32> to vector<2x16xf32>
    %56 = vector.shape_cast %55 : vector<2x16xf32> to vector<2x16x1xf32>
    %cst_19 = arith.constant dense<0.000000e+00> : vector<16x1xf32>
    %57 = vector.multi_reduction <add>, %56, %cst_19 [0] : vector<2x16x1xf32> to vector<16x1xf32>
    %58 = vector.shape_cast %57 : vector<16x1xf32> to vector<1x16x1xf32>
    %cst_20 = arith.constant 6.250000e-02 : f32
    %59 = vector.broadcast %cst_20 : f32 to vector<1x16x1xf32>
    %60 = arith.mulf %53, %59 : vector<1x16x1xf32>
    %cst_21 = arith.constant 6.250000e-02 : f32
    %61 = vector.broadcast %cst_21 : f32 to vector<1x16x1xf32>
    %62 = arith.mulf %58, %61 : vector<1x16x1xf32>
    %63 = arith.mulf %60, %60 : vector<1x16x1xf32>
    %64 = arith.subf %62, %63 : vector<1x16x1xf32>
    %cst_22 = arith.constant 9.99999974E-6 : f32
    %65 = vector.broadcast %cst_22 : f32 to vector<1x16x1xf32>
    %66 = arith.addf %64, %65 : vector<1x16x1xf32>
    %67 = math.rsqrt %66 : vector<1x16x1xf32>
    %68 = vector.shape_cast %10 : vector<16x1xf32> to vector<1x16x1xf32>
    %69 = arith.mulf %68, %67 : vector<1x16x1xf32>
    %70 = vector.broadcast %60 : vector<1x16x1xf32> to vector<2x16x8xf32>
    %71 = arith.subf %49, %70 : vector<2x16x8xf32>
    %72 = vector.broadcast %69 : vector<1x16x1xf32> to vector<2x16x8xf32>
    %73 = arith.mulf %71, %72 : vector<2x16x8xf32>
    %74 = vector.shape_cast %11 : vector<16x1xf32> to vector<1x16x1xf32>
    %75 = vector.broadcast %74 : vector<1x16x1xf32> to vector<2x16x8xf32>
    %76 = arith.addf %73, %75 : vector<2x16x8xf32>
    %77 = vector.shape_cast %76 : vector<2x16x8xf32> to vector<32x8xf32>
    %cst_23 = arith.constant dense<0.000000e+00> : vector<32x8xf32>
    %78 = tpu.matmul %77, %2, %cst_23 {dimension_numbers = #tpu.dot_dimension_numbers<[1], [0], [0], [1], [0, 0, 1, 1], [], []>} : vector<32x8xf32>, vector<8x8xf32>, vector<32x8xf32> -> vector<32x8xf32>
    %79 = vector.broadcast %6 : vector<1x8xf32> to vector<32x8xf32>
    %80 = arith.addf %78, %79 : vector<32x8xf32>
    %81 = vector.shape_cast %80 : vector<32x8xf32> to vector<2x16x8xf32>
    %c0_24 = arith.constant 0 : index
    %c0_25 = arith.constant 0 : index
    %c0_26 = arith.constant 0 : index
    %82 = vector.load %arg3[%c0_24, %c0_25, %c0_26] : memref<2x16x8xf32, #tpu.memory_space<vmem>>, vector<2x16x8xf32>
    tpu.vector_store %arg3[%c0_24, %c0_25, %c0_26], %81 {strides = array<i32>} : memref<2x16x8xf32, #tpu.memory_space<vmem>>, vector<2x16x8xf32>,
    return
  }
}

</mosaic_0001>

<llo_original>
// kernel: class_head_forward.1
$region0: #{class_head_forward.1}
  #allocation0 [shape = 'u32[]', space=smem, size = 0x4, offset = 0x4, fixed_abs, tag = 'smem constant byte address 0x4 - core index']
  #allocation1 [shape = 'u32[72,128]{1,0:T(1,128)}', space=vmem, size = 0x9000, scoped, tag = 'internal scratch']
  %s0 = inlined_call_operand.vmem [shape: f32[2,16,32], index: 0, kind: input, shape index: {}]
  %s1 = inlined_call_operand.vmem [shape: f32[104,64], index: 1, kind: input, shape index: {}]
  %s2 = inlined_call_operand.vmem [shape: f32[24,64], index: 2, kind: input, shape index: {}]
  %s3 = inlined_call_operand.vmem [shape: f32[2,16,8], index: 3, kind: output, shape index: {}]
  %s4 = sld [smem:[#allocation0]]
  $region22: #{class_head_forward.1} parent=0
    _
  %s6 = ssub.s32 1, %s4
  %s7 = scalar_select 0, %s6, %s4
  // Predicated region
  $region2: #{class_head_forward.1} parent=0 // pred_check
    _
  $region3: #{class_head_forward.1} parent=0 // pred_check_branch
    %9 = sbr.rel (0) target = $region5
  $region4: #{class_head_forward.1} parent=0 // pred_region
    _
  $region5: #{class_head_forward.1} parent=0 // pred_fallthru
    _
  // Predicated region
  $region6: #{class_head_forward.1} parent=0 // pred_check
    _
  $region7: #{class_head_forward.1} parent=0 // pred_check_branch
    %11 = sbr.rel (0) target = $region9
  $region8: #{class_head_forward.1} parent=0 // pred_region
    _
  $region9: #{class_head_forward.1} parent=0 // pred_fallthru
    _
  // Predicated region
  $region10: #{class_head_forward.1} parent=0 // pred_check
    _
  $region11: #{class_head_forward.1} parent=0 // pred_check_branch
    %13 = sbr.rel (0) target = $region13
  $region12: #{class_head_forward.1} parent=0 // pred_region
    _
  $region13: #{class_head_forward.1} parent=0 // pred_fallthru
    _
  %v14 = vld [vmem:[%s1] sm:$0xff]
  %v15 = vld [vmem:[%s1 + $0x8] sm:$0xff]
  %v16 = vld [vmem:[%s1 + $0x10] sm:$0xff]
  %v17 = vld [vmem:[%s1 + $0x18] sm:$0xff]
  %v18 = vld [vmem:[%s1 + $0x20] sm:$0xff]
  %v19 = vld [vmem:[%s1 + $0x28] sm:$0xff]
  %v20 = vld [vmem:[%s1 + $0x30] sm:$0xff]
  %v21 = vld [vmem:[%s1 + $0x38] sm:$0xff]
  %v22 = vld [vmem:[%s1 + $0x40] sm:$0xff]
  %v23 = vld [vmem:[%s1 + $0x48] sm:$0xff]
  %v24 = vld [vmem:[%s1 + $0x50] sm:$0xff]
  %v25 = vld [vmem:[%s1 + $0x58] sm:$0xff]
  %v26 = vld [vmem:[%s1 + $0x60] sm:$0xff]
  %v27 = vld [vmem:[%s2] sm:$0xff]
  %v28 = vld [vmem:[%s2 + $0x8] sm:$0xff]
  %v29 = vld [vmem:[%s2 + $0x10] sm:$0xff]
  %v30 = vld [vmem:[%s0] sm:$0xff]
  %v31 = vld [vmem:[%s0 + $0x8] sm:$0xff]
  %v32 = vld [vmem:[%s0 + $0x10] sm:$0xff]
  %v33 = vld [vmem:[%s0 + $0x18] sm:$0xff]
  %v34 = vperm.slane %v27, 0
  %vm35 = vcmask 261120
  %v37 = vsel %vm35, %v30, 0
  %v40 = vsel %vm35, %v31, 0
  %v43 = vsel %vm35, %v32, 0
  %v46 = vsel %vm35, %v33, 0
  %48 = vmatpush.msra.mxu0 0.0
  %49 = vmatpush.msra.mxu0 0.0
  %50 = vmatpush.msra.mxu0 0.0
  %51 = vmatpush.msra.mxu0 0.0
  %52 = vmatpush.msra.mxu0 0.0
  %53 = vmatpush.msra.mxu0 0.0
  %54 = vmatpush.msra.mxu0 0.0
  %55 = vmatpush.msra.mxu0 0.0
  %56 = vmatpush.msra.mxu0 0.0
  %57 = vmatpush.msra.mxu0 0.0
  %58 = vmatpush.msra.mxu0 0.0
  %59 = vmatpush.msra.mxu0 0.0
  %60 = vmatpush.msra.mxu0 %v17
  %61 = vmatpush.msra.mxu0 %v16
  %62 = vmatpush.msra.mxu0 %v15
  %63 = vmatpush.msra.mxu0 %v14
  %64 = vmatmul.f32.gmra.mxu0 %v37
  %v65 = vpop.f32.mrf.mxu0
  %v66 = vadd.f32 %v34, %v65
  %67 = vmatmul.f32.gmra.mxu0 %v40
  %v68 = vpop.f32.mrf.mxu0
  %v69 = vadd.f32 %v34, %v68
  %70 = vmatmul.f32.gmra.mxu0 %v43
  %v71 = vpop.f32.mrf.mxu0
  %v72 = vadd.f32 %v34, %v71
  %73 = vmatmul.f32.gmra.mxu0 %v46
  %v74 = vpop.f32.mrf.mxu0
  %v75 = vadd.f32 %v34, %v74
  %76 = vdwg.mxu0
  %vm77 = vcmask 523264
  %v78 = vsel %vm77, %v66, 0.0
  %79 = vadd.xlane.f32.xlu0 %v78
  %v80 = vpop.xlane.xlu0 %79
  %v81 = vsel %vm77, %v69, 0.0
  %82 = vadd.xlane.f32.xlu0 %v81
  %v83 = vpop.xlane.xlu0 %82
  %v84 = vsel %vm77, %v72, 0.0
  %85 = vadd.xlane.f32.xlu0 %v84
  %v86 = vpop.xlane.xlu0 %85
  %v87 = vsel %vm77, %v75, 0.0
  %88 = vadd.xlane.f32.xlu0 %v87
  %v89 = vpop.xlane.xlu0 %88
  %v90 = vadd.f32 %v80, %v86
  %v91 = vadd.f32 %v83, %v89
  %v92 = vmul.f32 %v66, %v66
  %v93 = vmul.f32 %v69, %v69
  %v94 = vmul.f32 %v72, %v72
  %v95 = vmul.f32 %v75, %v75
  %v96 = vsel %vm77, %v92, 0.0
  %97 = vadd.xlane.f32.xlu0 %v96
  %v98 = vpop.xlane.xlu0 %97
  %v99 = vsel %vm77, %v93, 0.0
  %100 = vadd.xlane.f32.xlu0 %v99
  %v101 = vpop.xlane.xlu0 %100
  %v102 = vsel %vm77, %v94, 0.0
  %103 = vadd.xlane.f32.xlu0 %v102
  %v104 = vpop.xlane.xlu0 %103
  %v105 = vsel %vm77, %v95, 0.0
  %106 = vadd.xlane.f32.xlu0 %v105
  %v107 = vpop.xlane.xlu0 %106
  %v108 = vadd.f32 %v98, %v104
  %v109 = vadd.f32 %v101, %v107
  %v110 = vmul.f32 %v90, 0.0078125
  %v111 = vmul.f32 %v91, 0.0078125
  %v112 = vmul.f32 %v108, 0.0078125
  %v113 = vmul.f32 %v109, 0.0078125
  %v114 = vmul.f32 %v110, %v110
  %v115 = vmul.f32 %v111, %v111
  %v116 = vsub.f32 %v112, %v114
  %v117 = vsub.f32 %v113, %v115
  %v118 = vadd.f32 %v116, 1e-05
  %v119 = vadd.f32 %v117, 1e-05
  %v120 = vrsqrt.pop %v118
  %v121 = vmul.f32 %v120, %v118
  %v122 = vmul.f32 %v121, %v120
  %v123 = vmul.f32 0.5, %v122
  %v124 = vsub.f32 1.5, %v123
  %v125 = vmul.f32 %v120, %v124
  %vm126 = vweird.f32 %v118
  %vm127 = vweird.f32 %v120
  %vm128 = vmor %vm126, %vm127
  %v129 = vsel %vm128, %v120, %v125
  %v130 = vrsqrt.pop %v119
  %v131 = vmul.f32 %v130, %v119
  %v132 = vmul.f32 %v131, %v130
  %v133 = vmul.f32 0.5, %v132
  %v134 = vsub.f32 1.5, %v133
  %v135 = vmul.f32 %v130, %v134
  %vm136 = vweird.f32 %v119
  %vm137 = vweird.f32 %v130
  %vm138 = vmor %vm136, %vm137
  %v139 = vsel %vm138, %v130, %v135
  %v140 = vmul.f32 %v28, %v129
  %v141 = vmul.f32 %v29, %v139
  %v142 = vsub.f32 %v66, %v110
  %v143 = vsub.f32 %v69, %v111
  %v144 = vsub.f32 %v72, %v110
  %v145 = vsub.f32 %v75, %v111
  %147 = vset.pattern.permute.xlu0 0
  %148 = vperm.xlu0 %147, %v140
  %v149 = vpop.permute.xlu0 %148
  %152 = vset.pattern.permute.xlu0 0
  %153 = vperm.xlu0 %152, %v141
  %v154 = vpop.permute.xlu0 %153
  %v156 = vmul.f32 %v142, %v149
  %v157 = vmul.f32 %v143, %v154
  %v158 = vmul.f32 %v144, %v149
  %v159 = vmul.f32 %v145, %v154
  %161 = vset.pattern.permute.xlu0 1
  %162 = vperm.xlu0 %161, %v28
  %v163 = vpop.permute.xlu0 %162
  %166 = vset.pattern.permute.xlu0 1
  %167 = vperm.xlu0 %166, %v29
  %v168 = vpop.permute.xlu0 %167
  %v170 = vadd.f32 %v156, %v163
  %v171 = vadd.f32 %v157, %v168
  %v172 = vadd.f32 %v158, %v163
  %v173 = vadd.f32 %v159, %v168
  %v174 = vperm.slane %v27, 1
  %v176 = vsel %vm77, %v170, 0
  %v179 = vsel %vm77, %v171, 0
  %v182 = vsel %vm77, %v172, 0
  %v185 = vsel %vm77, %v173, 0
  %187 = vmatpush.msra.mxu0 0.0
  %188 = vmatpush.msra.mxu0 0.0
  %189 = vmatpush.msra.mxu0 0.0
  %190 = vmatpush.msra.mxu0 0.0
  %191 = vmatpush.msra.mxu0 0.0
  %192 = vmatpush.msra.mxu0 0.0
  %193 = vmatpush.msra.mxu0 0.0
  %194 = vmatpush.msra.mxu0 0.0
  %195 = vmatpush.msra.mxu0 %v25
  %196 = vmatpush.msra.mxu0 %v24
  %197 = vmatpush.msra.mxu0 %v23
  %198 = vmatpush.msra.mxu0 %v22
  %199 = vmatpush.msra.mxu0 %v21
  %200 = vmatpush.msra.mxu0 %v20
  %201 = vmatpush.msra.mxu0 %v19
  %202 = vmatpush.msra.mxu0 %v18
  %203 = vmatmul.f32.gmra.mxu0 %v176
  %v204 = vpop.f32.mrf.mxu0
  %v205 = vadd.f32 %v174, %v204
  %206 = vmatmul.f32.gmra.mxu0 %v179
  %v207 = vpop.f32.mrf.mxu0
  %v208 = vadd.f32 %v174, %v207
  %209 = vmatmul.f32.gmra.mxu0 %v182
  %v210 = vpop.f32.mrf.mxu0
  %v211 = vadd.f32 %v174, %v210
  %212 = vmatmul.f32.gmra.mxu0 %v185
  %v213 = vpop.f32.mrf.mxu0
  %v214 = vadd.f32 %v174, %v213
  %215 = vdwg.mxu0
  %vm216 = vcmask 64512
  %v217 = vsel %vm216, %v205, 0.0
  %218 = vadd.xlane.f32.xlu0 %v217
  %v219 = vpop.xlane.xlu0 %218
  %v220 = vsel %vm216, %v208, 0.0
  %221 = vadd.xlane.f32.xlu0 %v220
  %v222 = vpop.xlane.xlu0 %221
  %v223 = vsel %vm216, %v211, 0.0
  %224 = vadd.xlane.f32.xlu0 %v223
  %v225 = vpop.xlane.xlu0 %224
  %v226 = vsel %vm216, %v214, 0.0
  %227 = vadd.xlane.f32.xlu0 %v226
  %v228 = vpop.xlane.xlu0 %227
  %v229 = vadd.f32 %v219, %v225
  %v230 = vadd.f32 %v222, %v228
  %v231 = vmul.f32 %v205, %v205
  %v232 = vmul.f32 %v208, %v208
  %v233 = vmul.f32 %v211, %v211
  %v234 = vmul.f32 %v214, %v214
  %v235 = vsel %vm216, %v231, 0.0
  %236 = vadd.xlane.f32.xlu0 %v235
  %v237 = vpop.xlane.xlu0 %236
  %v238 = vsel %vm216, %v232, 0.0
  %239 = vadd.xlane.f32.xlu0 %v238
  %v240 = vpop.xlane.xlu0 %239
  %v241 = vsel %vm216, %v233, 0.0
  %242 = vadd.xlane.f32.xlu0 %v241
  %v243 = vpop.xlane.xlu0 %242
  %v244 = vsel %vm216, %v234, 0.0
  %245 = vadd.xlane.f32.xlu0 %v244
  %v246 = vpop.xlane.xlu0 %245
  %v247 = vadd.f32 %v237, %v243
  %v248 = vadd.f32 %v240, %v246
  %v249 = vmul.f32 %v229, 0.0625
  %v250 = vmul.f32 %v230, 0.0625
  %v251 = vmul.f32 %v247, 0.0625
  %v252 = vmul.f32 %v248, 0.0625
  %v253 = vmul.f32 %v249, %v249
  %v254 = vmul.f32 %v250, %v250
  %v255 = vsub.f32 %v251, %v253
  %v256 = vsub.f32 %v252, %v254
  %v257 = vadd.f32 %v255, 1e-05
  %v258 = vadd.f32 %v256, 1e-05
  %v259 = vrsqrt.pop %v257
  %v260 = vmul.f32 %v259, %v257
  %v261 = vmul.f32 %v260, %v259
  %v262 = vmul.f32 0.5, %v261
  %v263 = vsub.f32 1.5, %v262
  %v264 = vmul.f32 %v259, %v263
  %vm265 = vweird.f32 %v257
  %vm266 = vweird.f32 %v259
  %vm267 = vmor %vm265, %vm266
  %v268 = vsel %vm267, %v259, %v264
  %v269 = vrsqrt.pop %v258
  %v270 = vmul.f32 %v269, %v258
  %v271 = vmul.f32 %v270, %v269
  %v272 = vmul.f32 0.5, %v271
  %v273 = vsub.f32 1.5, %v272
  %v274 = vmul.f32 %v269, %v273
  %vm275 = vweird.f32 %v258
  %vm276 = vweird.f32 %v269
  %vm277 = vmor %vm275, %vm276
  %v278 = vsel %vm277, %v269, %v274
  %v279 = vmul.f32 %v28, %v268
  %v280 = vmul.f32 %v29, %v278
  %v281 = vsub.f32 %v205, %v249
  %v282 = vsub.f32 %v208, %v250
  %v283 = vsub.f32 %v211, %v249
  %v284 = vsub.f32 %v214, %v250
  %286 = vset.pattern.permute.xlu0 2
  %287 = vperm.xlu0 %286, %v279
  %v288 = vpop.permute.xlu0 %287
  %291 = vset.pattern.permute.xlu0 2
  %292 = vperm.xlu0 %291, %v280
  %v293 = vpop.permute.xlu0 %292
  %v295 = vmul.f32 %v281, %v288
  %v296 = vmul.f32 %v282, %v293
  %v297 = vmul.f32 %v283, %v288
  %v298 = vmul.f32 %v284, %v293
  %299 = vset.pattern.permute.xlu0 3
  %300 = vperm.xlu0 %299, %v28
  %v301 = vpop.permute.xlu0 %300
  %303 = vset.pattern.permute.xlu0 3
  %304 = vperm.xlu0 %303, %v29
  %v305 = vpop.permute.xlu0 %304
  %v307 = vadd.f32 %v295, %v301
  %v308 = vadd.f32 %v296, %v305
  %v309 = vadd.f32 %v297, %v301
  %v310 = vadd.f32 %v298, %v305
  %v311 = vperm.slane %v27, 2
  %v313 = vsel %vm216, %v307, 0
  %v316 = vsel %vm216, %v308, 0
  %v319 = vsel %vm216, %v309, 0
  %v322 = vsel %vm216, %v310, 0
  %324 = vmatpush.msra.mxu0 0.0
  %325 = vmatpush.msra.mxu0 0.0
  %326 = vmatpush.msra.mxu0 0.0
  %327 = vmatpush.msra.mxu0 0.0
  %328 = vmatpush.msra.mxu0 0.0
  %329 = vmatpush.msra.mxu0 0.0
  %330 = vmatpush.msra.mxu0 0.0
  %331 = vmatpush.msra.mxu0 0.0
  %332 = vmatpush.msra.mxu0 0.0
  %333 = vmatpush.msra.mxu0 0.0
  %334 = vmatpush.msra.mxu0 0.0
  %335 = vmatpush.msra.mxu0 0.0
  %336 = vmatpush.msra.mxu0 0.0
  %337 = vmatpush.msra.mxu0 0.0
  %338 = vmatpush.msra.mxu0 0.0
  %339 = vmatpush.msra.mxu0 %v26
  %340 = vmatmul.f32.gmra.mxu0 %v313
  %v341 = vpop.f32.mrf.mxu0
  %v342 = vadd.f32 %v311, %v341
  %343 = vmatmul.f32.gmra.mxu0 %v316
  %v344 = vpop.f32.mrf.mxu0
  %v345 = vadd.f32 %v311, %v344
  %346 = vmatmul.f32.gmra.mxu0 %v319
  %v347 = vpop.f32.mrf.mxu0
  %v348 = vadd.f32 %v311, %v347
  %349 = vmatmul.f32.gmra.mxu0 %v322
  %v350 = vpop.f32.mrf.mxu0
  %v351 = vadd.f32 %v311, %v350
  %352 = vdwg.mxu0
  %353 = vst.msk [vmem:[%s3] sm:$0xff] %vm216, %v342
  %354 = vst.msk [vmem:[%s3 + $0x8] sm:$0xff] %vm216, %v345
  %355 = vst.msk [vmem:[%s3 + $0x10] sm:$0xff] %vm216, %v348
  %356 = vst.msk [vmem:[%s3 + $0x18] sm:$0xff] %vm216, %v351
  // Predicated region
  $region14: #{class_head_forward.1} parent=0 // pred_check
    _
  $region15: #{class_head_forward.1} parent=0 // pred_check_branch
    %358 = sbr.rel (0) target = $region17
  $region16: #{class_head_forward.1} parent=0 // pred_region
    _
  $region17: #{class_head_forward.1} parent=0 // pred_fallthru
    _
  // Predicated region
  $region18: #{class_head_forward.1} parent=0 // pred_check
    _
  $region19: #{class_head_forward.1} parent=0 // pred_check_branch
    %360 = sbr.rel (0) target = $region21
  $region20: #{class_head_forward.1} parent=0 // pred_region
    _
  $region21: #{class_head_forward.1} parent=0 // pred_fallthru
    _

</llo_original>
